<compile_context>
chip_gen: v5e
topology: v5e:2x2
jax: 0.10.0
libtpu: 0.0.40
codegen_flags: <defaults>
</compile_context>

<pallas_src>
import functools

import numpy as np
import jax
import jax.numpy as jnp
from jax.experimental import pallas as pl
from jax.experimental.pallas import tpu as pltpu


def _round_up(x, m):
    return -(-x // m) * m


# ---------------------------------------------------------------------------
# Fused forward kernel: one invocation per batch tile; all layers unrolled.
# ---------------------------------------------------------------------------
def _fused_mlp_kernel(*refs, num_blocks, num_block_layers, use_skip):
    # refs = (x, Wf, bf, W0, b0, W1, b1, ..., Wn, bn, out)
    x_ref, wf_ref, bf_ref = refs[0], refs[1], refs[2]
    o_ref = refs[-1]
    wb = refs[3:-1]

    def matmul(h, w_ref):
        # bf16 operands on the MXU, f32 accumulation.
        return jnp.dot(h.astype(w_ref.dtype), w_ref[...],
                       preferred_element_type=jnp.float32)

    # organize_params + normalize + h1 pre-activation were folded into
    # (Wf, bf) at pack time, so the chain starts with one matmul + ReLU.
    h = jnp.maximum(matmul(x_ref[...], wf_ref) + bf_ref[...], 0.0)

    li = 0
    for _ in range(num_blocks):                        # parallel-resnet blocks
        res = h
        for _ in range(num_block_layers):
            h = jnp.maximum(matmul(h, wb[2 * li]) + wb[2 * li + 1][...], 0.0)
            li += 1
        y = matmul(h, wb[2 * li]) + wb[2 * li + 1][...]
        li += 1
        if use_skip:
            y = y + res                                # skip connection
        h = jnp.maximum(y, 0.0)

    # h2 + sigmoid; h2 columns were zero-padded to a multiple of 128 at pack
    # time so this store is lane-dense.
    y = matmul(h, wb[2 * li]) + wb[2 * li + 1][...]
    o_ref[...] = jax.nn.sigmoid(y).astype(o_ref.dtype)


# ---------------------------------------------------------------------------
# Tiling / wrapper
# ---------------------------------------------------------------------------
def _choose_tiling(B):
    """Return (padded_batch, batch_tile).

    Pad the batch to a sublane multiple (no ragged / non-multiple-of-8
    tiles), then: tiny batch -> one tile; medium batch -> exactly two tiles
    so v7x's two TensorCores both get work via the "parallel" grid axis;
    large batch -> ~1024-row tiles."""
    MAX_TB = 1024                       # few-MB f32 activation tile << VMEM
    Bp = _round_up(B, 8)
    if Bp < 16:
        return Bp, Bp
    if Bp <= 2 * MAX_TB:
        Bp = _round_up(Bp, 16)
        return Bp, Bp // 2
    Bp = _round_up(Bp, MAX_TB)
    return Bp, MAX_TB


def fused_forward(packed, X, cfg):
    """Single fused pallas_call implementing the whole module forward."""
    B, F = X.shape
    out_total = cfg["num_zbins"] * cfg["output_kbins"] * 2
    wb = packed["wb"]
    out_padded = wb[-1].shape[1]        # lane-dense (multiple of 128) h2 width

    Bp, TB = _choose_tiling(B)
    if Bp != B:                         # ragged batch: pad here, slice at end
        X = jnp.pad(X, ((0, Bp - B), (0, 0)))
    grid = (Bp // TB,)

    consts = [packed["Wf"], packed["bf"], *wb]
    # Batch-tiled input/output; weights use a constant index map so they are
    # DMA'd once and stay VMEM-resident across the whole grid.
    # TODO(synk): constants still get default 2-deep buffering; at this config
    # that is only tens of KiB, so pl.Buffered(1) is not worth the lowering
    # risk -- revisit if num_zbins / mlp_dims grow (VMEM grows ~nz^2*d^2).
    in_specs = [pl.BlockSpec((TB, F), lambda b: (b, 0))]
    in_specs += [pl.BlockSpec(a.shape, lambda b: (0, 0)) for a in consts]
    out_specs = pl.BlockSpec((TB, out_padded), lambda b: (b, 0))

    mats = [packed["Wf"]] + list(wb[0::2])
    flops = 2 * Bp * int(sum(int(m.shape[0]) * int(m.shape[1]) for m in mats))
    bytes_accessed = int(X.size) * X.dtype.itemsize
    bytes_accessed += int(sum(int(a.size) * a.dtype.itemsize for a in consts))
    bytes_accessed += Bp * out_padded * 4
    cost = pl.CostEstimate(flops=flops, transcendentals=Bp * out_padded,
                           bytes_accessed=bytes_accessed)

    kern = functools.partial(
        _fused_mlp_kernel,
        num_blocks=cfg["num_mlp_blocks"],
        num_block_layers=cfg["num_block_layers"],
        use_skip=cfg["use_skip_connection"],
    )
    out = pl.pallas_call(
        kern,
        out_shape=jax.ShapeDtypeStruct((Bp, out_padded), jnp.float32),
        grid=grid,
        in_specs=in_specs,
        out_specs=out_specs,
        compiler_params=pltpu.CompilerParams(
            dimension_semantics=("parallel",)),
        cost_estimate=cost,
    )(X, *consts)
    return out[:B, :out_total]


# ---------------------------------------------------------------------------
# Parameter construction / packing (mirrors the PyTorch module's layers).
# ---------------------------------------------------------------------------
def init_params(key, cfg):
    """Deterministic synthetic parameter init (shapes per module __init__)."""
    nz = cfg["num_zbins"]
    nc = cfg["num_cosmo_params"]
    nb = cfg["num_bias_params"]
    # TODO(synk): upstream __init__ declares h1 input as nc+nb, but the
    # forward's organize_params (nz>1) produces nc+2*nb features per channel;
    # we use the forward-consistent dimension so the pipeline is shape-correct.
    in_dim = nc + 2 * nb if nz > 1 else nc + nb
    dims = cfg["mlp_dims"]
    out_dim = cfg["output_kbins"] * 2

    def lin(k, i, o):
        kw, kb = jax.random.split(k)
        w = jax.random.normal(kw, (nz, i, o), jnp.float32) * (1.0 / jnp.sqrt(i))
        b = jax.random.normal(kb, (nz, 1, o), jnp.float32) * 0.01
        return {"w": w, "b": b}

    keys = iter(jax.random.split(key, 64))
    params = {}
    # bounds buffer (2, in_dim): normalize(x) = (x - lo) / (hi - lo)
    params["bounds"] = jnp.stack(
        [-jnp.ones((in_dim,), jnp.float32), jnp.ones((in_dim,), jnp.float32)])
    params["h1"] = lin(next(keys), in_dim, dims[0])
    blocks = []
    for bi in range(cfg["num_mlp_blocks"]):
        layers = [lin(next(keys), dims[bi], dims[bi])
                  for _ in range(cfg["num_block_layers"])]
        proj = lin(next(keys), dims[bi], dims[bi + 1])
        blocks.append({"layers": layers, "proj": proj})
    params["blocks"] = blocks
    params["h2"] = lin(next(keys), dims[-1], out_dim)
    return params


def _block_diag(w):
    """(nz, I, O) per-channel weights -> (nz*I, nz*O) block-diagonal weight."""
    w = np.asarray(w, np.float64)
    nz, I, O = w.shape
    out = np.zeros((nz * I, nz * O), np.float64)
    for c in range(nz):
        out[c * I:(c + 1) * I, c * O:(c + 1) * O] = w[c]
    return out


def pack_params(params, cfg, *, matmul_dtype=jnp.bfloat16):
    """One-time packing (outside jit) into the fused kernel's layout.

    NOTE: block-diagonal packing is a small-nz optimization (nz x zero MACs,
    nz^2 x weight storage); keep it while nz*max(mlp_dims) <= one MXU tile.
    """
    nz = cfg["num_zbins"]
    nc = cfg["num_cosmo_params"]
    nb = cfg["num_bias_params"]
    P = nc + 2 * nb if nz > 1 else nc + nb

    # Selection/duplication matrix reproducing organize_params as X @ S.
    S = np.zeros((nc + nb, nz * P), np.float64)
    if nz == 1:
        S[:, :] = np.eye(nc + nb)
    else:
        for j in range(nc):
            S[j, j] = 1.0                      # cosmo params -> channel 0
        for k in range(nb):
            S[nc + k, nc + 2 * k] = 1.0        # bias -> even slots
            S[nc + k, nc + 2 * k + 1] = 1.0    # bias -> odd slots (self-pair)
        # channels 1..nz-1 stay zero, exactly as the reference loop produces.

    bounds = np.asarray(params["bounds"], np.float64)
    lo = np.tile(bounds[0], nz)                            # (nz*P,)
    inv = 1.0 / np.tile(bounds[1] - bounds[0], nz)         # (nz*P,)

    def flat_bias(b):
        return np.asarray(b, np.float64).reshape(1, -1)

    # ---- fold organize_params + normalize + h1 into a single affine ----
    # relu(((X@S) - lo)*inv @ W1 + b1) == relu(X @ Wf + bf)
    W1 = _block_diag(params["h1"]["w"])
    b1 = flat_bias(params["h1"]["b"])
    Wf = S @ (inv[:, None] * W1)                           # (nc+nb, nz*dims0)
    bf = b1 - (lo * inv)[None, :] @ W1                     # (1, nz*dims0)

    wb = []
    for blk in params["blocks"]:
        for l in blk["layers"]:
            wb += [_block_diag(l["w"]), flat_bias(l["b"])]
        wb += [_block_diag(blk["proj"]["w"]), flat_bias(blk["proj"]["b"])]
    W2 = _block_diag(params["h2"]["w"])
    b2 = flat_bias(params["h2"]["b"])

    # Lane-dense output: zero-pad h2 columns up to a multiple of 128 so the
    # final stores are full-lane; the wrapper slices the real columns out.
    out_total = W2.shape[1]
    out_padded = _round_up(max(out_total, 128), 128)
    W2 = np.pad(W2, ((0, 0), (0, out_padded - out_total)))
    b2 = np.pad(b2, ((0, 0), (0, out_padded - out_total)))
    wb += [W2, b2]

    return {
        "Wf": jnp.asarray(Wf, matmul_dtype),
        "bf": jnp.asarray(bf, jnp.float32),
        # matmul weights in bf16 (MXU-native); biases stay f32 (VPU add).
        "wb": [jnp.asarray(a, matmul_dtype if i % 2 == 0 else jnp.float32)
               for i, a in enumerate(wb)],
    }


# ---------------------------------------------------------------------------
# Pure-JAX f32 reference (mirrors the PyTorch forward) for validation.
# ---------------------------------------------------------------------------
def organize_params_ref(params, nz, nc, nb):
    if nz == 1:
        return params
    B = params.shape[0]
    row = jnp.zeros((B, nc + 2 * nb), params.dtype)
    row = row.at[:, :nc].set(params[:, :nc])
    bias = params[:, nc:nc + nb]
    row = row.at[:, nc::2].set(bias)
    row = row.at[:, nc + 1::2].set(bias)
    new = jnp.zeros((B, nz, nc + 2 * nb), params.dtype)
    new = new.at[:, 0, :].set(row)
    return new


def reference_forward(params, X, cfg):
    nz, nc, nb = cfg["num_zbins"], cfg["num_cosmo_params"], cfg["num_bias_params"]
    Xo = organize_params_ref(X, nz, nc, nb)
    if nz == 1:
        Xo = Xo[:, None, :]
    Xn = (Xo - params["bounds"][0]) / (params["bounds"][1] - params["bounds"][0])
    h = Xn.transpose(1, 0, 2)                             # (nz, B, P)

    def lin(h, lyr, act, res=None):
        y = jnp.einsum("cbi,cio->cbo", h, lyr["w"]) + lyr["b"]
        if res is not None:
            y = y + res
        return jnp.maximum(y, 0.0) if act == "relu" else jax.nn.sigmoid(y)

    h = lin(h, params["h1"], "relu")
    for blk in params["blocks"]:
        res = h
        for l in blk["layers"]:
            h = lin(h, l, "relu")
        h = lin(h, blk["proj"], "relu",
                res if cfg["use_skip_connection"] else None)
    out = lin(h, params["h2"], "sigmoid")
    return out.transpose(1, 0, 2).reshape(X.shape[0], -1)


if __name__ == "__main__":
    cfg = dict(
        num_zbins=2,
        num_cosmo_params=4,
        num_bias_params=2,
        mlp_dims=[32, 32, 32],
        num_mlp_blocks=2,
        num_block_layers=2,
        use_skip_connection=True,
        output_kbins=16,
    )
    key = jax.random.PRNGKey(0)
    kp, kx = jax.random.split(key)
    params = init_params(kp, cfg)
    packed = pack_params(params, cfg)          # one-time packing, outside jit
    # TODO(synk): for tiny-batch inference loops, batch requests before
    # calling -- at B=2 launch + weight staging dominates wall clock and no
    # in-kernel change can recover that.

    batch = 2
    X = jax.random.uniform(
        kx, (batch, cfg["num_cosmo_params"] + cfg["num_bias_params"]),
        jnp.float32, minval=-1.0, maxval=1.0)

    fwd = jax.jit(functools.partial(fused_forward, cfg=cfg))
    out = fwd(packed, X)
    jax.block_until_ready(out)

    out_total = cfg["num_zbins"] * cfg["output_kbins"] * 2
    assert out.shape == (batch, out_total), out.shape
    assert bool(jnp.all(jnp.isfinite(out)))
    assert bool(jnp.all((out >= 0.0) & (out <= 1.0)))     # sigmoid output

    ref = reference_forward(params, X, cfg)
    # bf16 matmul operands + f32 accumulation vs f32 reference.
    assert bool(jnp.allclose(out, ref, atol=2e-2, rtol=2e-2)), \
        float(jnp.max(jnp.abs(out - ref)))
    print("KERNEL_OK")
</pallas_src>

<mosaic_0001>
module attributes {stable_mosaic.version = 11 : i64} {
  func.func @_fused_mlp_kernel(%arg0: i32, %arg1: memref<8x6xf32, #tpu.memory_space<vmem>>, %arg2: memref<6x64xbf16, #tpu.memory_space<vmem>>, %arg3: memref<1x64xf32, #tpu.memory_space<vmem>>, %arg4: memref<64x64xbf16, #tpu.memory_space<vmem>>, %arg5: memref<1x64xf32, #tpu.memory_space<vmem>>, %arg6: memref<64x64xbf16, #tpu.memory_space<vmem>>, %arg7: memref<1x64xf32, #tpu.memory_space<vmem>>, %arg8: memref<64x64xbf16, #tpu.memory_space<vmem>>, %arg9: memref<1x64xf32, #tpu.memory_space<vmem>>, %arg10: memref<64x64xbf16, #tpu.memory_space<vmem>>, %arg11: memref<1x64xf32, #tpu.memory_space<vmem>>, %arg12: memref<64x64xbf16, #tpu.memory_space<vmem>>, %arg13: memref<1x64xf32, #tpu.memory_space<vmem>>, %arg14: memref<64x64xbf16, #tpu.memory_space<vmem>>, %arg15: memref<1x64xf32, #tpu.memory_space<vmem>>, %arg16: memref<64x128xbf16, #tpu.memory_space<vmem>>, %arg17: memref<1x128xf32, #tpu.memory_space<vmem>>, %arg18: memref<8x128xf32, #tpu.memory_space<vmem>>) attributes {dimension_semantics = [#tpu.dimension_semantics<parallel>], iteration_bounds = array<i64: 1>, scalar_prefetch = 0 : i64, scratch_operands = 0 : i64, tpu.core_type = #tpu.core_type<tc>, window_params = [{transform_indices = @transform_0, window_bounds = array<i64: 8, 6>}, {pipeline_mode = #tpu.pipeline_mode<synchronous>, transform_indices = @transform_1, window_bounds = array<i64: 6, 64>}, {pipeline_mode = #tpu.pipeline_mode<synchronous>, transform_indices = @transform_2, window_bounds = array<i64: 1, 64>}, {pipeline_mode = #tpu.pipeline_mode<synchronous>, transform_indices = @transform_3, window_bounds = array<i64: 64, 64>}, {pipeline_mode = #tpu.pipeline_mode<synchronous>, transform_indices = @transform_4, window_bounds = array<i64: 1, 64>}, {pipeline_mode = #tpu.pipeline_mode<synchronous>, transform_indices = @transform_5, window_bounds = array<i64: 64, 64>}, {pipeline_mode = #tpu.pipeline_mode<synchronous>, transform_indices = @transform_6, window_bounds = array<i64: 1, 64>}, {pipeline_mode = #tpu.pipeline_mode<synchronous>, transform_indices = @transform_7, window_bounds = array<i64: 64, 64>}, {pipeline_mode = #tpu.pipeline_mode<synchronous>, transform_indices = @transform_8, window_bounds = array<i64: 1, 64>}, {pipeline_mode = #tpu.pipeline_mode<synchronous>, transform_indices = @transform_9, window_bounds = array<i64: 64, 64>}, {pipeline_mode = #tpu.pipeline_mode<synchronous>, transform_indices = @transform_10, window_bounds = array<i64: 1, 64>}, {pipeline_mode = #tpu.pipeline_mode<synchronous>, transform_indices = @transform_11, window_bounds = array<i64: 64, 64>}, {pipeline_mode = #tpu.pipeline_mode<synchronous>, transform_indices = @transform_12, window_bounds = array<i64: 1, 64>}, {pipeline_mode = #tpu.pipeline_mode<synchronous>, transform_indices = @transform_13, window_bounds = array<i64: 64, 64>}, {pipeline_mode = #tpu.pipeline_mode<synchronous>, transform_indices = @transform_14, window_bounds = array<i64: 1, 64>}, {pipeline_mode = #tpu.pipeline_mode<synchronous>, transform_indices = @transform_15, window_bounds = array<i64: 64, 128>}, {pipeline_mode = #tpu.pipeline_mode<synchronous>, transform_indices = @transform_16, window_bounds = array<i64: 1, 128>}, {transform_indices = @transform_17, window_bounds = array<i64: 8, 128>}]} {
    %c0 = arith.constant 0 : index
    %c0_0 = arith.constant 0 : index
    %0 = vector.load %arg1[%c0, %c0_0] : memref<8x6xf32, #tpu.memory_space<vmem>>, vector<8x6xf32>
    %1 = arith.truncf %0 : vector<8x6xf32> to vector<8x6xbf16>
    %c0_1 = arith.constant 0 : index
    %c0_2 = arith.constant 0 : index
    %2 = vector.load %arg2[%c0_1, %c0_2] : memref<6x64xbf16, #tpu.memory_space<vmem>>, vector<6x64xbf16>
    %cst = arith.constant dense<0.000000e+00> : vector<8x64xf32>
    %3 = tpu.matmul %1, %2, %cst {dimension_numbers = #tpu.dot_dimension_numbers<[1], [0], [0], [1], [0, 0, 1, 1], [], []>} : vector<8x6xbf16>, vector<6x64xbf16>, vector<8x64xf32> -> vector<8x64xf32>
    %c0_3 = arith.constant 0 : index
    %c0_4 = arith.constant 0 : index
    %4 = vector.load %arg3[%c0_3, %c0_4] : memref<1x64xf32, #tpu.memory_space<vmem>>, vector<1x64xf32>
    %5 = vector.broadcast %4 : vector<1x64xf32> to vector<8x64xf32>
    %6 = arith.addf %3, %5 : vector<8x64xf32>
    %cst_5 = arith.constant 0.000000e+00 : f32
    %7 = vector.broadcast %cst_5 : f32 to vector<8x64xf32>
    %8 = arith.maximumf %6, %7 : vector<8x64xf32>
    %9 = arith.truncf %8 : vector<8x64xf32> to vector<8x64xbf16>
    %c0_6 = arith.constant 0 : index
    %c0_7 = arith.constant 0 : index
    %10 = vector.load %arg4[%c0_6, %c0_7] : memref<64x64xbf16, #tpu.memory_space<vmem>>, vector<64x64xbf16>
    %cst_8 = arith.constant dense<0.000000e+00> : vector<8x64xf32>
    %11 = tpu.matmul %9, %10, %cst_8 {dimension_numbers = #tpu.dot_dimension_numbers<[1], [0], [0], [1], [0, 0, 1, 1], [], []>} : vector<8x64xbf16>, vector<64x64xbf16>, vector<8x64xf32> -> vector<8x64xf32>
    %c0_9 = arith.constant 0 : index
    %c0_10 = arith.constant 0 : index
    %12 = vector.load %arg5[%c0_9, %c0_10] : memref<1x64xf32, #tpu.memory_space<vmem>>, vector<1x64xf32>
    %13 = vector.broadcast %12 : vector<1x64xf32> to vector<8x64xf32>
    %14 = arith.addf %11, %13 : vector<8x64xf32>
    %cst_11 = arith.constant 0.000000e+00 : f32
    %15 = vector.broadcast %cst_11 : f32 to vector<8x64xf32>
    %16 = arith.maximumf %14, %15 : vector<8x64xf32>
    %17 = arith.truncf %16 : vector<8x64xf32> to vector<8x64xbf16>
    %c0_12 = arith.constant 0 : index
    %c0_13 = arith.constant 0 : index
    %18 = vector.load %arg6[%c0_12, %c0_13] : memref<64x64xbf16, #tpu.memory_space<vmem>>, vector<64x64xbf16>
    %cst_14 = arith.constant dense<0.000000e+00> : vector<8x64xf32>
    %19 = tpu.matmul %17, %18, %cst_14 {dimension_numbers = #tpu.dot_dimension_numbers<[1], [0], [0], [1], [0, 0, 1, 1], [], []>} : vector<8x64xbf16>, vector<64x64xbf16>, vector<8x64xf32> -> vector<8x64xf32>
    %c0_15 = arith.constant 0 : index
    %c0_16 = arith.constant 0 : index
    %20 = vector.load %arg7[%c0_15, %c0_16] : memref<1x64xf32, #tpu.memory_space<vmem>>, vector<1x64xf32>
    %21 = vector.broadcast %20 : vector<1x64xf32> to vector<8x64xf32>
    %22 = arith.addf %19, %21 : vector<8x64xf32>
    %cst_17 = arith.constant 0.000000e+00 : f32
    %23 = vector.broadcast %cst_17 : f32 to vector<8x64xf32>
    %24 = arith.maximumf %22, %23 : vector<8x64xf32>
    %25 = arith.truncf %24 : vector<8x64xf32> to vector<8x64xbf16>
    %c0_18 = arith.constant 0 : index
    %c0_19 = arith.constant 0 : index
    %26 = vector.load %arg8[%c0_18, %c0_19] : memref<64x64xbf16, #tpu.memory_space<vmem>>, vector<64x64xbf16>
    %cst_20 = arith.constant dense<0.000000e+00> : vector<8x64xf32>
    %27 = tpu.matmul %25, %26, %cst_20 {dimension_numbers = #tpu.dot_dimension_numbers<[1], [0], [0], [1], [0, 0, 1, 1], [], []>} : vector<8x64xbf16>, vector<64x64xbf16>, vector<8x64xf32> -> vector<8x64xf32>
    %c0_21 = arith.constant 0 : index
    %c0_22 = arith.constant 0 : index
    %28 = vector.load %arg9[%c0_21, %c0_22] : memref<1x64xf32, #tpu.memory_space<vmem>>, vector<1x64xf32>
    %29 = vector.broadcast %28 : vector<1x64xf32> to vector<8x64xf32>
    %30 = arith.addf %27, %29 : vector<8x64xf32>
    %31 = arith.addf %30, %8 : vector<8x64xf32>
    %cst_23 = arith.constant 0.000000e+00 : f32
    %32 = vector.broadcast %cst_23 : f32 to vector<8x64xf32>
    %33 = arith.maximumf %31, %32 : vector<8x64xf32>
    %34 = arith.truncf %33 : vector<8x64xf32> to vector<8x64xbf16>
    %c0_24 = arith.constant 0 : index
    %c0_25 = arith.constant 0 : index
    %35 = vector.load %arg10[%c0_24, %c0_25] : memref<64x64xbf16, #tpu.memory_space<vmem>>, vector<64x64xbf16>
    %cst_26 = arith.constant dense<0.000000e+00> : vector<8x64xf32>
    %36 = tpu.matmul %34, %35, %cst_26 {dimension_numbers = #tpu.dot_dimension_numbers<[1], [0], [0], [1], [0, 0, 1, 1], [], []>} : vector<8x64xbf16>, vector<64x64xbf16>, vector<8x64xf32> -> vector<8x64xf32>
    %c0_27 = arith.constant 0 : index
    %c0_28 = arith.constant 0 : index
    %37 = vector.load %arg11[%c0_27, %c0_28] : memref<1x64xf32, #tpu.memory_space<vmem>>, vector<1x64xf32>
    %38 = vector.broadcast %37 : vector<1x64xf32> to vector<8x64xf32>
    %39 = arith.addf %36, %38 : vector<8x64xf32>
    %cst_29 = arith.constant 0.000000e+00 : f32
    %40 = vector.broadcast %cst_29 : f32 to vector<8x64xf32>
    %41 = arith.maximumf %39, %40 : vector<8x64xf32>
    %42 = arith.truncf %41 : vector<8x64xf32> to vector<8x64xbf16>
    %c0_30 = arith.constant 0 : index
    %c0_31 = arith.constant 0 : index
    %43 = vector.load %arg12[%c0_30, %c0_31] : memref<64x64xbf16, #tpu.memory_space<vmem>>, vector<64x64xbf16>
    %cst_32 = arith.constant dense<0.000000e+00> : vector<8x64xf32>
    %44 = tpu.matmul %42, %43, %cst_32 {dimension_numbers = #tpu.dot_dimension_numbers<[1], [0], [0], [1], [0, 0, 1, 1], [], []>} : vector<8x64xbf16>, vector<64x64xbf16>, vector<8x64xf32> -> vector<8x64xf32>
    %c0_33 = arith.constant 0 : index
    %c0_34 = arith.constant 0 : index
    %45 = vector.load %arg13[%c0_33, %c0_34] : memref<1x64xf32, #tpu.memory_space<vmem>>, vector<1x64xf32>
    %46 = vector.broadcast %45 : vector<1x64xf32> to vector<8x64xf32>
    %47 = arith.addf %44, %46 : vector<8x64xf32>
    %cst_35 = arith.constant 0.000000e+00 : f32
    %48 = vector.broadcast %cst_35 : f32 to vector<8x64xf32>
    %49 = arith.maximumf %47, %48 : vector<8x64xf32>
    %50 = arith.truncf %49 : vector<8x64xf32> to vector<8x64xbf16>
    %c0_36 = arith.constant 0 : index
    %c0_37 = arith.constant 0 : index
    %51 = vector.load %arg14[%c0_36, %c0_37] : memref<64x64xbf16, #tpu.memory_space<vmem>>, vector<64x64xbf16>
    %cst_38 = arith.constant dense<0.000000e+00> : vector<8x64xf32>
    %52 = tpu.matmul %50, %51, %cst_38 {dimension_numbers = #tpu.dot_dimension_numbers<[1], [0], [0], [1], [0, 0, 1, 1], [], []>} : vector<8x64xbf16>, vector<64x64xbf16>, vector<8x64xf32> -> vector<8x64xf32>
    %c0_39 = arith.constant 0 : index
    %c0_40 = arith.constant 0 : index
    %53 = vector.load %arg15[%c0_39, %c0_40] : memref<1x64xf32, #tpu.memory_space<vmem>>, vector<1x64xf32>
    %54 = vector.broadcast %53 : vector<1x64xf32> to vector<8x64xf32>
    %55 = arith.addf %52, %54 : vector<8x64xf32>
    %56 = arith.addf %55, %33 : vector<8x64xf32>
    %cst_41 = arith.constant 0.000000e+00 : f32
    %57 = vector.broadcast %cst_41 : f32 to vector<8x64xf32>
    %58 = arith.maximumf %56, %57 : vector<8x64xf32>
    %59 = arith.truncf %58 : vector<8x64xf32> to vector<8x64xbf16>
    %c0_42 = arith.constant 0 : index
    %c0_43 = arith.constant 0 : index
    %60 = vector.load %arg16[%c0_42, %c0_43] : memref<64x128xbf16, #tpu.memory_space<vmem>>, vector<64x128xbf16>
    %cst_44 = arith.constant dense<0.000000e+00> : vector<8x128xf32>
    %61 = tpu.matmul %59, %60, %cst_44 {dimension_numbers = #tpu.dot_dimension_numbers<[1], [0], [0], [1], [0, 0, 1, 1], [], []>} : vector<8x64xbf16>, vector<64x128xbf16>, vector<8x128xf32> -> vector<8x128xf32>
    %c0_45 = arith.constant 0 : index
    %c0_46 = arith.constant 0 : index
    %62 = vector.load %arg17[%c0_45, %c0_46] : memref<1x128xf32, #tpu.memory_space<vmem>>, vector<1x128xf32>
    %63 = vector.broadcast %62 : vector<1x128xf32> to vector<8x128xf32>
    %64 = arith.addf %61, %63 : vector<8x128xf32>
    %65 = arith.negf %64 : vector<8x128xf32>
    %66 = math.exp %65 : vector<8x128xf32>
    %cst_47 = arith.constant 1.000000e+00 : f32
    %67 = vector.broadcast %cst_47 : f32 to vector<8x128xf32>
    %68 = arith.addf %67, %66 : vector<8x128xf32>
    %69 = arith.divf %67, %68 : vector<8x128xf32>
    %c0_48 = arith.constant 0 : index
    %c0_49 = arith.constant 0 : index
    %70 = vector.load %arg18[%c0_48, %c0_49] : memref<8x128xf32, #tpu.memory_space<vmem>>, vector<8x128xf32>
    tpu.vector_store %arg18[%c0_48, %c0_49], %69 {strides = array<i32>} : memref<8x128xf32, #tpu.memory_space<vmem>>, vector<8x128xf32>,
    return
  }
  func.func @transform_0(%arg0: i32) -> (i32, i32) {
    %c0_i32 = arith.constant 0 : i32
    %c0_i32_0 = arith.constant 0 : i32
    return %arg0, %c0_i32 : i32, i32
  }
  func.func @transform_1(%arg0: i32) -> (i32, i32) {
    %c0_i32 = arith.constant 0 : i32
    %c0_i32_0 = arith.constant 0 : i32
    %c0_i32_1 = arith.constant 0 : i32
    return %c0_i32, %c0_i32_0 : i32, i32
  }
  func.func @transform_2(%arg0: i32) -> (i32, i32) {
    %c0_i32 = arith.constant 0 : i32
    %c0_i32_0 = arith.constant 0 : i32
    %c0_i32_1 = arith.constant 0 : i32
    return %c0_i32, %c0_i32_0 : i32, i32
  }
  func.func @transform_3(%arg0: i32) -> (i32, i32) {
    %c0_i32 = arith.constant 0 : i32
    %c0_i32_0 = arith.constant 0 : i32
    %c0_i32_1 = arith.constant 0 : i32
    return %c0_i32, %c0_i32_0 : i32, i32
  }
  func.func @transform_4(%arg0: i32) -> (i32, i32) {
    %c0_i32 = arith.constant 0 : i32
    %c0_i32_0 = arith.constant 0 : i32
    %c0_i32_1 = arith.constant 0 : i32
    return %c0_i32, %c0_i32_0 : i32, i32
  }
  func.func @transform_5(%arg0: i32) -> (i32, i32) {
    %c0_i32 = arith.constant 0 : i32
    %c0_i32_0 = arith.constant 0 : i32
    %c0_i32_1 = arith.constant 0 : i32
    return %c0_i32, %c0_i32_0 : i32, i32
  }
  func.func @transform_6(%arg0: i32) -> (i32, i32) {
    %c0_i32 = arith.constant 0 : i32
    %c0_i32_0 = arith.constant 0 : i32
    %c0_i32_1 = arith.constant 0 : i32
    return %c0_i32, %c0_i32_0 : i32, i32
  }
  func.func @transform_7(%arg0: i32) -> (i32, i32) {
    %c0_i32 = arith.constant 0 : i32
    %c0_i32_0 = arith.constant 0 : i32
    %c0_i32_1 = arith.constant 0 : i32
    return %c0_i32, %c0_i32_0 : i32, i32
  }
  func.func @transform_8(%arg0: i32) -> (i32, i32) {
    %c0_i32 = arith.constant 0 : i32
    %c0_i32_0 = arith.constant 0 : i32
    %c0_i32_1 = arith.constant 0 : i32
    return %c0_i32, %c0_i32_0 : i32, i32
  }
  func.func @transform_9(%arg0: i32) -> (i32, i32) {
    %c0_i32 = arith.constant 0 : i32
    %c0_i32_0 = arith.constant 0 : i32
    %c0_i32_1 = arith.constant 0 : i32
    return %c0_i32, %c0_i32_0 : i32, i32
  }
  func.func @transform_10(%arg0: i32) -> (i32, i32) {
    %c0_i32 = arith.constant 0 : i32
    %c0_i32_0 = arith.constant 0 : i32
    %c0_i32_1 = arith.constant 0 : i32
    return %c0_i32, %c0_i32_0 : i32, i32
  }
  func.func @transform_11(%arg0: i32) -> (i32, i32) {
    %c0_i32 = arith.constant 0 : i32
    %c0_i32_0 = arith.constant 0 : i32
    %c0_i32_1 = arith.constant 0 : i32
    return %c0_i32, %c0_i32_0 : i32, i32
  }
  func.func @transform_12(%arg0: i32) -> (i32, i32) {
    %c0_i32 = arith.constant 0 : i32
    %c0_i32_0 = arith.constant 0 : i32
    %c0_i32_1 = arith.constant 0 : i32
    return %c0_i32, %c0_i32_0 : i32, i32
  }
  func.func @transform_13(%arg0: i32) -> (i32, i32) {
    %c0_i32 = arith.constant 0 : i32
    %c0_i32_0 = arith.constant 0 : i32
    %c0_i32_1 = arith.constant 0 : i32
    return %c0_i32, %c0_i32_0 : i32, i32
  }
  func.func @transform_14(%arg0: i32) -> (i32, i32) {
    %c0_i32 = arith.constant 0 : i32
    %c0_i32_0 = arith.constant 0 : i32
    %c0_i32_1 = arith.constant 0 : i32
    return %c0_i32, %c0_i32_0 : i32, i32
  }
  func.func @transform_15(%arg0: i32) -> (i32, i32) {
    %c0_i32 = arith.constant 0 : i32
    %c0_i32_0 = arith.constant 0 : i32
    %c0_i32_1 = arith.constant 0 : i32
    return %c0_i32, %c0_i32_0 : i32, i32
  }
  func.func @transform_16(%arg0: i32) -> (i32, i32) {
    %c0_i32 = arith.constant 0 : i32
    %c0_i32_0 = arith.constant 0 : i32
    %c0_i32_1 = arith.constant 0 : i32
    return %c0_i32, %c0_i32_0 : i32, i32
  }
  func.func @transform_17(%arg0: i32) -> (i32, i32) {
    %c0_i32 = arith.constant 0 : i32
    %c0_i32_0 = arith.constant 0 : i32
    return %arg0, %c0_i32 : i32, i32
  }
}

</mosaic_0001>

<llo_original>
// kernel: fused_forward.1
$region0: #{fused_forward.1}
  #allocation0 [shape = 'u32[]', space=smem, size = 0x4, offset = 0x4, fixed_abs, tag = 'smem constant byte address 0x4 - core index']
  #allocation1 [shape = 'u32[72,128]{1,0:T(1,128)}', space=vmem, size = 0x9000, scoped, tag = 'internal scratch']
  %s0 = inlined_call_operand.vmem [shape: f32[8,6], index: 0, kind: input, shape index: {}]
  %s1 = inlined_call_operand.vmem [shape: bf16[6,64], index: 1, kind: input, shape index: {}]
  %s2 = inlined_call_operand.vmem [shape: f32[1,64], index: 2, kind: input, shape index: {}]
  %s3 = inlined_call_operand.hbm [shape: bf16[64,64], index: 3, kind: input, shape index: {}]
  %s4 = inlined_call_operand.vmem [shape: f32[1,64], index: 4, kind: input, shape index: {}]
  %s5 = inlined_call_operand.hbm [shape: bf16[64,64], index: 5, kind: input, shape index: {}]
  %s6 = inlined_call_operand.vmem [shape: f32[1,64], index: 6, kind: input, shape index: {}]
  %s7 = inlined_call_operand.hbm [shape: bf16[64,64], index: 7, kind: input, shape index: {}]
  %s8 = inlined_call_operand.vmem [shape: f32[1,64], index: 8, kind: input, shape index: {}]
  %s9 = inlined_call_operand.hbm [shape: bf16[64,64], index: 9, kind: input, shape index: {}]
  %s10 = inlined_call_operand.vmem [shape: f32[1,64], index: 10, kind: input, shape index: {}]
  %s11 = inlined_call_operand.hbm [shape: bf16[64,64], index: 11, kind: input, shape index: {}]
  %s12 = inlined_call_operand.vmem [shape: f32[1,64], index: 12, kind: input, shape index: {}]
  %s13 = inlined_call_operand.hbm [shape: bf16[64,64], index: 13, kind: input, shape index: {}]
  %s14 = inlined_call_operand.vmem [shape: f32[1,64], index: 14, kind: input, shape index: {}]
  %s15 = inlined_call_operand.hbm [shape: bf16[64,128], index: 15, kind: input, shape index: {}]
  %s16 = inlined_call_operand.vmem [shape: f32[1,128], index: 16, kind: input, shape index: {}]
  %s17 = inlined_call_operand.vmem [shape: f32[8,128], index: 17, kind: output, shape index: {}]
  %s18 = sld [smem:[#allocation0]]
  $region106: #{fused_forward.1} parent=0
    _
  %s20 = ssub.s32 1, %s18
  %s21 = scalar_select 0, %s20, %s18
  $region1: #{fused_forward.1} parent=0
    #allocation2 [shape = 'u8[16384]{0}', space=vmem, size = 0x4000, scoped, tag = 'input window, operand 3, single buffered']
    #allocation3 [shape = 's32[1]{0}', space=sflag, size = 0x4, scoped, tag = 'scoped memory for fused_forward.1']
    #allocation4 [shape = 'u8[16384]{0}', space=vmem, size = 0x4000, scoped, tag = 'input window, operand 5, single buffered']
    #allocation5 [shape = 's32[1]{0}', space=sflag, size = 0x4, scoped, tag = 'scoped memory for fused_forward.1']
    #allocation6 [shape = 'u8[16384]{0}', space=vmem, size = 0x4000, scoped, tag = 'input window, operand 7, single buffered']
    #allocation7 [shape = 'u8[16384]{0}', space=vmem, size = 0x4000, scoped, tag = 'input window, operand 9, single buffered']
    #allocation8 [shape = 's32[1]{0}', space=sflag, size = 0x4, scoped, tag = 'scoped memory for fused_forward.1']
    #allocation9 [shape = 'u8[16384]{0}', space=vmem, size = 0x4000, scoped, tag = 'input window, operand 11, single buffered']
    #allocation10 [shape = 'u8[16384]{0}', space=vmem, size = 0x4000, scoped, tag = 'input window, operand 13, single buffered']
    #allocation11 [shape = 's32[1]{0}', space=sflag, size = 0x4, scoped, tag = 'scoped memory for fused_forward.1']
    #allocation12 [shape = 'u8[16384]{0}', space=vmem, size = 0x4000, scoped, tag = 'input window, operand 15, single buffered']
    %22 = vsyncpa [#allocation3], 0
    %23 = vsyncpa [#allocation5], 0
    %24 = vsyncpa [#allocation8], 0
    %25 = vsyncpa [#allocation11], 0
    // Predicated region
    $region2: #{fused_forward.1} parent=1 // pred_check
      _
    $region3: #{fused_forward.1} parent=1 // pred_check_branch
      %27 = sbr.rel (0) target = $region5
    $region4: #{fused_forward.1} parent=1 // pred_region
      _
    $region5: #{fused_forward.1} parent=1 // pred_fallthru
      _
    // Predicated region
    $region6: #{fused_forward.1} parent=1 // pred_check
      _
    $region7: #{fused_forward.1} parent=1 // pred_check_branch
      %29 = sbr.rel (0) target = $region9
    $region8: #{fused_forward.1} parent=1 // pred_region
      _
    $region9: #{fused_forward.1} parent=1 // pred_fallthru
      _
    // Predicated region
    $region10: #{fused_forward.1} parent=1 // pred_check
      _
    $region11: #{fused_forward.1} parent=1 // pred_check_branch
      %31 = sbr.rel (0) target = $region13
    $region12: #{fused_forward.1} parent=1 // pred_region
      _
    $region13: #{fused_forward.1} parent=1 // pred_fallthru
      _
    // Predicated region
    $region14: #{fused_forward.1} parent=1 // pred_check
      _
    $region15: #{fused_forward.1} parent=1 // pred_check_branch
      %33 = sbr.rel (0) target = $region17
    $region16: #{fused_forward.1} parent=1 // pred_region
      %35 = vsyncadd [#allocation3], 0
      %s36 = sshll.u32 %s3, 4
      %s37 = int_to_ptr.hbm [resolvable:$true] %s36
      %s38 = sshll.u32 [#allocation2], 4
      %s39 = int_to_ptr.vmem [resolvable:$true] %s38
      %44 = dma.hbm_to_vmem [thread:$0]  %s37, 512, %s39, [#allocation3], 64, 64, 4
    $region17: #{fused_forward.1} parent=1 // pred_fallthru
      _
    // Predicated region
    $region18: #{fused_forward.1} parent=1 // pred_check
      _
    $region19: #{fused_forward.1} parent=1 // pred_check_branch
      %46 = sbr.rel (0) target = $region21
    $region20: #{fused_forward.1} parent=1 // pred_region
      _
    $region21: #{fused_forward.1} parent=1 // pred_fallthru
      _
    // Predicated region
    $region22: #{fused_forward.1} parent=1 // pred_check
      _
    $region23: #{fused_forward.1} parent=1 // pred_check_branch
      %48 = sbr.rel (0) target = $region25
    $region24: #{fused_forward.1} parent=1 // pred_region
      %50 = vsyncadd [#allocation5], 0
      %s51 = sshll.u32 %s5, 4
      %s52 = int_to_ptr.hbm [resolvable:$true] %s51
      %s53 = sshll.u32 [#allocation4], 4
      %s54 = int_to_ptr.vmem [resolvable:$true] %s53
      %59 = dma.hbm_to_vmem [thread:$0]  %s52, 512, %s54, [#allocation5], 64, 64, 4
    $region25: #{fused_forward.1} parent=1 // pred_fallthru
      _
    // Predicated region
    $region26: #{fused_forward.1} parent=1 // pred_check
      _
    $region27: #{fused_forward.1} parent=1 // pred_check_branch
      %61 = sbr.rel (0) target = $region29
    $region28: #{fused_forward.1} parent=1 // pred_region
      _
    $region29: #{fused_forward.1} parent=1 // pred_fallthru
      _
    // Predicated region
    $region30: #{fused_forward.1} parent=1 // pred_check
      _
    $region31: #{fused_forward.1} parent=1 // pred_check_branch
      %63 = sbr.rel (0) target = $region33
    $region32: #{fused_forward.1} parent=1 // pred_region
      %65 = vsyncadd [#allocation5], 0
      %s66 = sshll.u32 %s7, 4
      %s67 = int_to_ptr.hbm [resolvable:$true] %s66
      %s68 = sshll.u32 [#allocation6], 4
      %s69 = int_to_ptr.vmem [resolvable:$true] %s68
      %74 = dma.hbm_to_vmem [thread:$0]  %s67, 512, %s69, [#allocation5], 64, 64, 4
    $region33: #{fused_forward.1} parent=1 // pred_fallthru
      _
    // Predicated region
    $region34: #{fused_forward.1} parent=1 // pred_check
      _
    $region35: #{fused_forward.1} parent=1 // pred_check_branch
      %76 = sbr.rel (0) target = $region37
    $region36: #{fused_forward.1} parent=1 // pred_region
      _
    $region37: #{fused_forward.1} parent=1 // pred_fallthru
      _
    // Predicated region
    $region38: #{fused_forward.1} parent=1 // pred_check
      _
    $region39: #{fused_forward.1} parent=1 // pred_check_branch
      %78 = sbr.rel (0) target = $region41
    $region40: #{fused_forward.1} parent=1 // pred_region
      %80 = vsyncadd [#allocation8], 0
      %s81 = sshll.u32 %s9, 4
      %s82 = int_to_ptr.hbm [resolvable:$true] %s81
      %s83 = sshll.u32 [#allocation7], 4
      %s84 = int_to_ptr.vmem [resolvable:$true] %s83
      %89 = dma.hbm_to_vmem [thread:$0]  %s82, 512, %s84, [#allocation8], 64, 64, 4
    $region41: #{fused_forward.1} parent=1 // pred_fallthru
      _
    // Predicated region
    $region42: #{fused_forward.1} parent=1 // pred_check
      _
    $region43: #{fused_forward.1} parent=1 // pred_check_branch
      %91 = sbr.rel (0) target = $region45
    $region44: #{fused_forward.1} parent=1 // pred_region
      _
    $region45: #{fused_forward.1} parent=1 // pred_fallthru
      _
    // Predicated region
    $region46: #{fused_forward.1} parent=1 // pred_check
      _
    $region47: #{fused_forward.1} parent=1 // pred_check_branch
      %93 = sbr.rel (0) target = $region49
    $region48: #{fused_forward.1} parent=1 // pred_region
      %95 = vsyncadd [#allocation8], 0
      %s96 = sshll.u32 %s11, 4
      %s97 = int_to_ptr.hbm [resolvable:$true] %s96
      %s98 = sshll.u32 [#allocation9], 4
      %s99 = int_to_ptr.vmem [resolvable:$true] %s98
      %104 = dma.hbm_to_vmem [thread:$0]  %s97, 512, %s99, [#allocation8], 64, 64, 4
    $region49: #{fused_forward.1} parent=1 // pred_fallthru
      _
    // Predicated region
    $region50: #{fused_forward.1} parent=1 // pred_check
      _
    $region51: #{fused_forward.1} parent=1 // pred_check_branch
      %106 = sbr.rel (0) target = $region53
    $region52: #{fused_forward.1} parent=1 // pred_region
      _
    $region53: #{fused_forward.1} parent=1 // pred_fallthru
      _
    // Predicated region
    $region54: #{fused_forward.1} parent=1 // pred_check
      _
    $region55: #{fused_forward.1} parent=1 // pred_check_branch
      %108 = sbr.rel (0) target = $region57
    $region56: #{fused_forward.1} parent=1 // pred_region
      %110 = vsyncadd [#allocation11], 0
      %s111 = sshll.u32 %s13, 4
      %s112 = int_to_ptr.hbm [resolvable:$true] %s111
      %s113 = sshll.u32 [#allocation10], 4
      %s114 = int_to_ptr.vmem [resolvable:$true] %s113
      %119 = dma.hbm_to_vmem [thread:$0]  %s112, 512, %s114, [#allocation11], 64, 64, 4
    $region57: #{fused_forward.1} parent=1 // pred_fallthru
      _
    // Predicated region
    $region58: #{fused_forward.1} parent=1 // pred_check
      _
    $region59: #{fused_forward.1} parent=1 // pred_check_branch
      %121 = sbr.rel (0) target = $region61
    $region60: #{fused_forward.1} parent=1 // pred_region
      _
    $region61: #{fused_forward.1} parent=1 // pred_fallthru
      _
    // Predicated region
    $region62: #{fused_forward.1} parent=1 // pred_check
      _
    $region63: #{fused_forward.1} parent=1 // pred_check_branch
      %123 = sbr.rel (0) target = $region65
    $region64: #{fused_forward.1} parent=1 // pred_region
      %125 = vsyncadd [#allocation11], 0
      %s126 = sshll.u32 %s15, 4
      %s127 = int_to_ptr.hbm [resolvable:$true] %s126
      %s128 = sshll.u32 [#allocation12], 4
      %s129 = int_to_ptr.vmem [resolvable:$true] %s128
      %134 = dma.hbm_to_vmem [thread:$0]  %s127, 512, %s129, [#allocation11], 64, 64, 4
    $region65: #{fused_forward.1} parent=1 // pred_fallthru
      _
    // Predicated region
    $region66: #{fused_forward.1} parent=1 // pred_check
      _
    $region67: #{fused_forward.1} parent=1 // pred_check_branch
      %136 = sbr.rel (0) target = $region69
    $region68: #{fused_forward.1} parent=1 // pred_region
      _
    $region69: #{fused_forward.1} parent=1 // pred_fallthru
      _
    // Predicated region
    $region70: #{fused_forward.1} parent=1 // pred_check
      _
    $region71: #{fused_forward.1} parent=1 // pred_check_branch
      %138 = sbr.rel (0) target = $region73
    $region72: #{fused_forward.1} parent=1 // pred_region
      %140 = dma.done [#allocation3], 512
    $region73: #{fused_forward.1} parent=1 // pred_fallthru
      _
    // Predicated region
    $region74: #{fused_forward.1} parent=1 // pred_check
      _
    $region75: #{fused_forward.1} parent=1 // pred_check_branch
      %142 = sbr.rel (0) target = $region77
    $region76: #{fused_forward.1} parent=1 // pred_region
      %144 = dma.done [#allocation5], 512
    $region77: #{fused_forward.1} parent=1 // pred_fallthru
      _
    // Predicated region
    $region78: #{fused_forward.1} parent=1 // pred_check
      _
    $region79: #{fused_forward.1} parent=1 // pred_check_branch
      %146 = sbr.rel (0) target = $region81
    $region80: #{fused_forward.1} parent=1 // pred_region
      %148 = dma.done [#allocation5], 512
    $region81: #{fused_forward.1} parent=1 // pred_fallthru
      _
    // Predicated region
    $region82: #{fused_forward.1} parent=1 // pred_check
      _
    $region83: #{fused_forward.1} parent=1 // pred_check_branch
      %150 = sbr.rel (0) target = $region85
    $region84: #{fused_forward.1} parent=1 // pred_region
      %152 = dma.done [#allocation8], 512
    $region85: #{fused_forward.1} parent=1 // pred_fallthru
      _
    // Predicated region
    $region86: #{fused_forward.1} parent=1 // pred_check
      _
    $region87: #{fused_forward.1} parent=1 // pred_check_branch
      %154 = sbr.rel (0) target = $region89
    $region88: #{fused_forward.1} parent=1 // pred_region
      %156 = dma.done [#allocation8], 512
    $region89: #{fused_forward.1} parent=1 // pred_fallthru
      _
    // Predicated region
    $region90: #{fused_forward.1} parent=1 // pred_check
      _
    $region91: #{fused_forward.1} parent=1 // pred_check_branch
      %158 = sbr.rel (0) target = $region93
    $region92: #{fused_forward.1} parent=1 // pred_region
      %160 = dma.done [#allocation11], 512
    $region93: #{fused_forward.1} parent=1 // pred_fallthru
      _
    // Predicated region
    $region94: #{fused_forward.1} parent=1 // pred_check
      _
    $region95: #{fused_forward.1} parent=1 // pred_check_branch
      %162 = sbr.rel (0) target = $region97
    $region96: #{fused_forward.1} parent=1 // pred_region
      %164 = dma.done [#allocation11], 512
    $region97: #{fused_forward.1} parent=1 // pred_fallthru
      _
    %v166 = vld [vmem:[%s0] sm:$0xff]
    %v167 = vpack.c.bf16 %v166, %v166
    %v168 = vld [vmem:[%s1] sm:$0x7]
    %v169 = vld [vmem:[%s2] sm:$0x1]
    %v171 = vperm.slane %v169, 0
    %vm173 = vcmask 48128
    %v175 = vsel %vm173, %v167, 0
    %vm177 = vcmask 1042432
    %v179 = vsel %vm177, %v168, 0
    %181 = vmatpush.bf16.msra.mxu0 0
    %182 = vmatpush.bf16.msra.mxu0 0
    %183 = vmatpush.bf16.msra.mxu0 0
    %184 = vmatpush.bf16.msra.mxu0 0
    %185 = vmatpush.bf16.msra.mxu0 0
    %186 = vmatpush.bf16.msra.mxu0 0
    %187 = vmatpush.bf16.msra.mxu0 0
    %188 = vmatpush.bf16.msra.mxu0 %v179
    %189 = vmatmul.bf16.gmra.mxu0 %v175
    %v190 = vpop.f32.mrf.mxu0
    %v191 = vadd.f32 %v171, %v190
    %v192 = vpop.f32.mrf.mxu0
    %193 = vdwg.mxu0
    %v194 = vmax.f32 %v191, 0.0
    %v195 = vpack.c.bf16 %v194, %v194
    %v196 = vld [vmem:[#allocation2] sm:$0xf]
    %v197 = vld [vmem:[#allocation2 + $0x4] sm:$0xf]
    %v198 = vld [vmem:[#allocation2 + $0x8] sm:$0xf]
    %v199 = vld [vmem:[#allocation2 + $0xc] sm:$0xf]
    %v200 = vld [vmem:[#allocation2 + $0x10] sm:$0xf]
    %v201 = vld [vmem:[#allocation2 + $0x14] sm:$0xf]
    %v202 = vld [vmem:[#allocation2 + $0x18] sm:$0xf]
    %v203 = vld [vmem:[#allocation2 + $0x1c] sm:$0xf]
    %v204 = vld [vmem:[%s4] sm:$0x1]
    %v206 = vperm.slane %v204, 0
    %v216 = vunpack.c.l.b16 %v196
    %v217 = vunpack.c.l.b16 %v197
    %v218 = vunpack.c.l.b16 %v198
    %v219 = vunpack.c.l.b16 %v199
    %v220 = vunpack.c.l.b16 %v200
    %v221 = vunpack.c.l.b16 %v201
    %v222 = vunpack.c.l.b16 %v202
    %v223 = vunpack.c.l.b16 %v203
    %v224 = vpack.c.b16 %v217, %v216
    %v225 = vpack.c.b16 %v219, %v218
    %v226 = vpack.c.b16 %v221, %v220
    %v227 = vpack.c.b16 %v223, %v222
    %vm232 = vcmask 523264
    %v234 = vsel %vm232, %v195, 0
    %236 = vmatpush.bf16.msra.mxu0 0
    %237 = vmatpush.bf16.msra.mxu0 0
    %238 = vmatpush.bf16.msra.mxu0 0
    %239 = vmatpush.bf16.msra.mxu0 0
    %240 = vmatpush.bf16.msra.mxu0 %v227
    %241 = vmatpush.bf16.msra.mxu0 %v226
    %242 = vmatpush.bf16.msra.mxu0 %v225
    %243 = vmatpush.bf16.msra.mxu0 %v224
    %244 = vmatmul.bf16.gmra.mxu0 %v234
    %v245 = vpop.f32.mrf.mxu0
    %v246 = vadd.f32 %v206, %v245
    %v247 = vpop.f32.mrf.mxu0
    %248 = vdwg.mxu0
    %v249 = vmax.f32 %v246, 0.0
    %v250 = vpack.c.bf16 %v249, %v249
    %v251 = vld [vmem:[#allocation4] sm:$0xf]
    %v252 = vld [vmem:[#allocation4 + $0x4] sm:$0xf]
    %v253 = vld [vmem:[#allocation4 + $0x8] sm:$0xf]
    %v254 = vld [vmem:[#allocation4 + $0xc] sm:$0xf]
    %v255 = vld [vmem:[#allocation4 + $0x10] sm:$0xf]
    %v256 = vld [vmem:[#allocation4 + $0x14] sm:$0xf]
    %v257 = vld [vmem:[#allocation4 + $0x18] sm:$0xf]
    %v258 = vld [vmem:[#allocation4 + $0x1c] sm:$0xf]
    %v259 = vld [vmem:[%s6] sm:$0x1]
    %v261 = vperm.slane %v259, 0
    %v271 = vunpack.c.l.b16 %v251
    %v272 = vunpack.c.l.b16 %v252
    %v273 = vunpack.c.l.b16 %v253
    %v274 = vunpack.c.l.b16 %v254
    %v275 = vunpack.c.l.b16 %v255
    %v276 = vunpack.c.l.b16 %v256
    %v277 = vunpack.c.l.b16 %v257
    %v278 = vunpack.c.l.b16 %v258
    %v279 = vpack.c.b16 %v272, %v271
    %v280 = vpack.c.b16 %v274, %v273
    %v281 = vpack.c.b16 %v276, %v275
    %v282 = vpack.c.b16 %v278, %v277
    %v288 = vsel %vm232, %v250, 0
    %290 = vmatpush.bf16.msra.mxu0 0
    %291 = vmatpush.bf16.msra.mxu0 0
    %292 = vmatpush.bf16.msra.mxu0 0
    %293 = vmatpush.bf16.msra.mxu0 0
    %294 = vmatpush.bf16.msra.mxu0 %v282
    %295 = vmatpush.bf16.msra.mxu0 %v281
    %296 = vmatpush.bf16.msra.mxu0 %v280
    %297 = vmatpush.bf16.msra.mxu0 %v279
    %298 = vmatmul.bf16.gmra.mxu0 %v288
    %v299 = vpop.f32.mrf.mxu0
    %v300 = vadd.f32 %v261, %v299
    %v301 = vpop.f32.mrf.mxu0
    %302 = vdwg.mxu0
    %v303 = vmax.f32 %v300, 0.0
    %v304 = vpack.c.bf16 %v303, %v303
    %v305 = vld [vmem:[#allocation6] sm:$0xf]
    %v306 = vld [vmem:[#allocation6 + $0x4] sm:$0xf]
    %v307 = vld [vmem:[#allocation6 + $0x8] sm:$0xf]
    %v308 = vld [vmem:[#allocation6 + $0xc] sm:$0xf]
    %v309 = vld [vmem:[#allocation6 + $0x10] sm:$0xf]
    %v310 = vld [vmem:[#allocation6 + $0x14] sm:$0xf]
    %v311 = vld [vmem:[#allocation6 + $0x18] sm:$0xf]
    %v312 = vld [vmem:[#allocation6 + $0x1c] sm:$0xf]
    %v313 = vld [vmem:[%s8] sm:$0x1]
    %v315 = vperm.slane %v313, 0
    %v325 = vunpack.c.l.b16 %v305
    %v326 = vunpack.c.l.b16 %v306
    %v327 = vunpack.c.l.b16 %v307
    %v328 = vunpack.c.l.b16 %v308
    %v329 = vunpack.c.l.b16 %v309
    %v330 = vunpack.c.l.b16 %v310
    %v331 = vunpack.c.l.b16 %v311
    %v332 = vunpack.c.l.b16 %v312
    %v333 = vpack.c.b16 %v326, %v325
    %v334 = vpack.c.b16 %v328, %v327
    %v335 = vpack.c.b16 %v330, %v329
    %v336 = vpack.c.b16 %v332, %v331
    %v342 = vsel %vm232, %v304, 0
    %344 = vmatpush.bf16.msra.mxu0 0
    %345 = vmatpush.bf16.msra.mxu0 0
    %346 = vmatpush.bf16.msra.mxu0 0
    %347 = vmatpush.bf16.msra.mxu0 0
    %348 = vmatpush.bf16.msra.mxu0 %v336
    %349 = vmatpush.bf16.msra.mxu0 %v335
    %350 = vmatpush.bf16.msra.mxu0 %v334
    %351 = vmatpush.bf16.msra.mxu0 %v333
    %352 = vmatmul.bf16.gmra.mxu0 %v342
    %v353 = vpop.f32.mrf.mxu0
    %v354 = vadd.f32 %v315, %v353
    %v355 = vpop.f32.mrf.mxu0
    %356 = vdwg.mxu0
    %v357 = vadd.f32 %v354, %v194
    %v358 = vmax.f32 %v357, 0.0
    %v359 = vpack.c.bf16 %v358, %v358
    %v360 = vld [vmem:[#allocation7] sm:$0xf]
    %v361 = vld [vmem:[#allocation7 + $0x4] sm:$0xf]
    %v362 = vld [vmem:[#allocation7 + $0x8] sm:$0xf]
    %v363 = vld [vmem:[#allocation7 + $0xc] sm:$0xf]
    %v364 = vld [vmem:[#allocation7 + $0x10] sm:$0xf]
    %v365 = vld [vmem:[#allocation7 + $0x14] sm:$0xf]
    %v366 = vld [vmem:[#allocation7 + $0x18] sm:$0xf]
    %v367 = vld [vmem:[#allocation7 + $0x1c] sm:$0xf]
    %v368 = vld [vmem:[%s10] sm:$0x1]
    %v370 = vperm.slane %v368, 0
    %v380 = vunpack.c.l.b16 %v360
    %v381 = vunpack.c.l.b16 %v361
    %v382 = vunpack.c.l.b16 %v362
    %v383 = vunpack.c.l.b16 %v363
    %v384 = vunpack.c.l.b16 %v364
    %v385 = vunpack.c.l.b16 %v365
    %v386 = vunpack.c.l.b16 %v366
    %v387 = vunpack.c.l.b16 %v367
    %v388 = vpack.c.b16 %v381, %v380
    %v389 = vpack.c.b16 %v383, %v382
    %v390 = vpack.c.b16 %v385, %v384
    %v391 = vpack.c.b16 %v387, %v386
    %v397 = vsel %vm232, %v359, 0
    %399 = vmatpush.bf16.msra.mxu0 0
    %400 = vmatpush.bf16.msra.mxu0 0
    %401 = vmatpush.bf16.msra.mxu0 0
    %402 = vmatpush.bf16.msra.mxu0 0
    %403 = vmatpush.bf16.msra.mxu0 %v391
    %404 = vmatpush.bf16.msra.mxu0 %v390
    %405 = vmatpush.bf16.msra.mxu0 %v389
    %406 = vmatpush.bf16.msra.mxu0 %v388
    %407 = vmatmul.bf16.gmra.mxu0 %v397
    %v408 = vpop.f32.mrf.mxu0
    %v409 = vadd.f32 %v370, %v408
    %v410 = vpop.f32.mrf.mxu0
    %411 = vdwg.mxu0
    %v412 = vmax.f32 %v409, 0.0
    %v413 = vpack.c.bf16 %v412, %v412
    %v414 = vld [vmem:[#allocation9] sm:$0xf]
    %v415 = vld [vmem:[#allocation9 + $0x4] sm:$0xf]
    %v416 = vld [vmem:[#allocation9 + $0x8] sm:$0xf]
    %v417 = vld [vmem:[#allocation9 + $0xc] sm:$0xf]
    %v418 = vld [vmem:[#allocation9 + $0x10] sm:$0xf]
    %v419 = vld [vmem:[#allocation9 + $0x14] sm:$0xf]
    %v420 = vld [vmem:[#allocation9 + $0x18] sm:$0xf]
    %v421 = vld [vmem:[#allocation9 + $0x1c] sm:$0xf]
    %v422 = vld [vmem:[%s12] sm:$0x1]
    %v424 = vperm.slane %v422, 0
    %v434 = vunpack.c.l.b16 %v414
    %v435 = vunpack.c.l.b16 %v415
    %v436 = vunpack.c.l.b16 %v416
    %v437 = vunpack.c.l.b16 %v417
    %v438 = vunpack.c.l.b16 %v418
    %v439 = vunpack.c.l.b16 %v419
    %v440 = vunpack.c.l.b16 %v420
    %v441 = vunpack.c.l.b16 %v421
    %v442 = vpack.c.b16 %v435, %v434
    %v443 = vpack.c.b16 %v437, %v436
    %v444 = vpack.c.b16 %v439, %v438
    %v445 = vpack.c.b16 %v441, %v440
    %v451 = vsel %vm232, %v413, 0
    %453 = vmatpush.bf16.msra.mxu0 0
    %454 = vmatpush.bf16.msra.mxu0 0
    %455 = vmatpush.bf16.msra.mxu0 0
    %456 = vmatpush.bf16.msra.mxu0 0
    %457 = vmatpush.bf16.msra.mxu0 %v445
    %458 = vmatpush.bf16.msra.mxu0 %v444
    %459 = vmatpush.bf16.msra.mxu0 %v443
    %460 = vmatpush.bf16.msra.mxu0 %v442
    %461 = vmatmul.bf16.gmra.mxu0 %v451
    %v462 = vpop.f32.mrf.mxu0
    %v463 = vadd.f32 %v424, %v462
    %v464 = vpop.f32.mrf.mxu0
    %465 = vdwg.mxu0
    %v466 = vmax.f32 %v463, 0.0
    %v467 = vpack.c.bf16 %v466, %v466
    %v468 = vld [vmem:[#allocation10] sm:$0xf]
    %v469 = vld [vmem:[#allocation10 + $0x4] sm:$0xf]
    %v470 = vld [vmem:[#allocation10 + $0x8] sm:$0xf]
    %v471 = vld [vmem:[#allocation10 + $0xc] sm:$0xf]
    %v472 = vld [vmem:[#allocation10 + $0x10] sm:$0xf]
    %v473 = vld [vmem:[#allocation10 + $0x14] sm:$0xf]
    %v474 = vld [vmem:[#allocation10 + $0x18] sm:$0xf]
    %v475 = vld [vmem:[#allocation10 + $0x1c] sm:$0xf]
    %v476 = vld [vmem:[%s14] sm:$0x1]
    %v478 = vperm.slane %v476, 0
    %v488 = vunpack.c.l.b16 %v468
    %v489 = vunpack.c.l.b16 %v469
    %v490 = vunpack.c.l.b16 %v470
    %v491 = vunpack.c.l.b16 %v471
    %v492 = vunpack.c.l.b16 %v472
    %v493 = vunpack.c.l.b16 %v473
    %v494 = vunpack.c.l.b16 %v474
    %v495 = vunpack.c.l.b16 %v475
    %v496 = vpack.c.b16 %v489, %v488
    %v497 = vpack.c.b16 %v491, %v490
    %v498 = vpack.c.b16 %v493, %v492
    %v499 = vpack.c.b16 %v495, %v494
    %v505 = vsel %vm232, %v467, 0
    %507 = vmatpush.bf16.msra.mxu0 0
    %508 = vmatpush.bf16.msra.mxu0 0
    %509 = vmatpush.bf16.msra.mxu0 0
    %510 = vmatpush.bf16.msra.mxu0 0
    %511 = vmatpush.bf16.msra.mxu0 %v499
    %512 = vmatpush.bf16.msra.mxu0 %v498
    %513 = vmatpush.bf16.msra.mxu0 %v497
    %514 = vmatpush.bf16.msra.mxu0 %v496
    %515 = vmatmul.bf16.gmra.mxu0 %v505
    %v516 = vpop.f32.mrf.mxu0
    %v517 = vadd.f32 %v478, %v516
    %v518 = vpop.f32.mrf.mxu0
    %519 = vdwg.mxu0
    %v520 = vadd.f32 %v517, %v358
    %v521 = vmax.f32 %v520, 0.0
    %v522 = vpack.c.bf16 %v521, %v521
    %v523 = vld [vmem:[#allocation12] sm:$0xf]
    %v524 = vld [vmem:[#allocation12 + $0x4] sm:$0xf]
    %v525 = vld [vmem:[#allocation12 + $0x8] sm:$0xf]
    %v526 = vld [vmem:[#allocation12 + $0xc] sm:$0xf]
    %v527 = vld [vmem:[#allocation12 + $0x10] sm:$0xf]
    %v528 = vld [vmem:[#allocation12 + $0x14] sm:$0xf]
    %v529 = vld [vmem:[#allocation12 + $0x18] sm:$0xf]
    %v530 = vld [vmem:[#allocation12 + $0x1c] sm:$0xf]
    %v531 = vld [vmem:[%s16] sm:$0x1]
    %v533 = vperm.slane %v531, 0
    %v543 = vunpack.c.l.b16 %v523
    %v544 = vunpack.c.l.b16 %v524
    %v545 = vunpack.c.l.b16 %v525
    %v546 = vunpack.c.l.b16 %v526
    %v547 = vunpack.c.l.b16 %v527
    %v548 = vunpack.c.l.b16 %v528
    %v549 = vunpack.c.l.b16 %v529
    %v550 = vunpack.c.l.b16 %v530
    %v551 = vpack.c.b16 %v544, %v543
    %v552 = vpack.c.b16 %v546, %v545
    %v553 = vpack.c.b16 %v548, %v547
    %v554 = vpack.c.b16 %v550, %v549
    %v560 = vsel %vm232, %v522, 0
    %562 = vmatpush.bf16.msra.mxu0 0
    %563 = vmatpush.bf16.msra.mxu0 0
    %564 = vmatpush.bf16.msra.mxu0 0
    %565 = vmatpush.bf16.msra.mxu0 0
    %566 = vmatpush.bf16.msra.mxu0 %v554
    %567 = vmatpush.bf16.msra.mxu0 %v553
    %568 = vmatpush.bf16.msra.mxu0 %v552
    %569 = vmatpush.bf16.msra.mxu0 %v551
    %570 = vmatmul.bf16.gmra.mxu0 %v560
    %v571 = vpop.f32.mrf.mxu0
    %v572 = vadd.f32 %v533, %v571
    %v573 = vpop.f32.mrf.mxu0
    %574 = vdwg.mxu0
    %v575 = vxor.u32 %v572, 2147483648
    %v576 = vmul.f32 %v575, 1.442695
    %v577 = vpow.pop %v576
    %v578 = vadd.f32 %v577, 1.0
    %v579 = vrcp.pop %v578
    %v580 = vmul.f32 %v578, %v579
    %v581 = vsub.f32 1.0, %v580
    %v582 = vmul.f32 %v579, %v581
    %v583 = vadd.f32 %v579, %v582
    %vm584 = vweird.f32 %v578
    %vm585 = vweird.f32 %v579
    %vm586 = vmor %vm584, %vm585
    %v587 = vsel %vm586, %v579, %v583
    %v588 = vand.u32 2147483647, %v578
    %vm589 = vcmp.eq.f32.partialorder %v588, 8.507059e+37
    %v590 = vand.u32 %v578, 2147483648
    %v591 = vor.u32 1.1754944e-38, %v590
    %v592 = vsel %vm589, %v591, %v587
    %v593 = vmul.f32 1.0, %v592
    %594 = vst [vmem:[%s17] sm:$0xff] %v593
    // Predicated region
    $region98: #{fused_forward.1} parent=1 // pred_check
      _
    $region99: #{fused_forward.1} parent=1 // pred_check_branch
      %596 = sbr.rel (0) target = $region101
    $region100: #{fused_forward.1} parent=1 // pred_region
      _
    $region101: #{fused_forward.1} parent=1 // pred_fallthru
      _
    // Predicated region
    $region102: #{fused_forward.1} parent=1 // pred_check
      _
    $region103: #{fused_forward.1} parent=1 // pred_check_branch
      %598 = sbr.rel (0) target = $region105
    $region104: #{fused_forward.1} parent=1 // pred_region
      _
    $region105: #{fused_forward.1} parent=1 // pred_fallthru
      _
    %599 = vsyncpa [#allocation3], 1
    %600 = vsyncpa [#allocation5], 1
    %601 = vsyncpa [#allocation8], 1
    %602 = vsyncpa [#allocation11], 1

</llo_original>
